<compile_context>
chip_gen: v7x
topology: tpu7x:2x2x1
jax: 0.10.0
libtpu: 0.0.40
codegen_flags: <defaults>
</compile_context>

<pallas_src>
import jax
import jax.numpy as jnp
from jax.experimental import pallas as pl
from jax.experimental.pallas import tpu as pltpu

EPS = 1e-6


def _round_up(n, m):
    return ((n + m - 1) // m) * m


def _saturation_kernel(x_sref, img_ref, out_ref):
    # x_sref : (B,) f32 in SMEM (scalar prefetch)
    # img_ref: (1, C, tile_n) block of the flattened image
    # out_ref: (1, C, tile_n)
    b = pl.program_id(0)
    x = x_sref[b]

    img = img_ref[...].astype(jnp.float32)

    # channel-wise min / max  (torch dim=1, keepdim=True)
    cmin = jnp.min(img, axis=1, keepdims=True)
    cmax = jnp.max(img, axis=1, keepdims=True)
    var = cmax - cmin
    ran = cmax + cmin
    mean = ran * 0.5

    @pl.when(x >= 0.0)
    def _positive():
        # s = var / (ran + eps)          if mean < 0.5
        #     var / (2 - ran + eps)      otherwise
        denom = jnp.where(mean < 0.5, ran, 2.0 - ran)
        s = var / (denom + EPS)
        a_sel = jnp.where(x + s > 1.0, s, 1.0 - x)
        a = 1.0 / (a_sel + EPS) - 1.0          # exact divide (keeps 1e-5 tol)
        out = img + (img - mean) * a
        out_ref[...] = jnp.clip(out, 0.0, 1.0).astype(out_ref.dtype)

    @pl.when(x < 0.0)
    def _negative():
        out = mean + (img - mean) * (1.0 + x)
        out_ref[...] = jnp.clip(out, 0.0, 1.0).astype(out_ref.dtype)


def saturation_filter(image, x, *, max_tile_elems=64 * 1024):
    """image: (B, C, H, W) float32; x: (B, 1, 1, 1) float32 -> (B, C, H, W)."""
    B, C, H, W = image.shape
    N = H * W

    # Flatten spatial dims and make the last (lane) dim 128-dense.
    img_flat = image.reshape(B, C, N)
    tile_n = min(_round_up(N, 128), max_tile_elems)
    tile_n = max(128, (tile_n // 128) * 128)          # multiple of 128
    n_pad = _round_up(N, tile_n)
    if n_pad != N:
        img_flat = jnp.pad(img_flat, ((0, 0), (0, 0), (0, n_pad - N)))

    x_scalars = x.reshape(B).astype(jnp.float32)
    grid = (B, n_pad // tile_n)

    out_flat = pl.pallas_call(
        _saturation_kernel,
        out_shape=jax.ShapeDtypeStruct((B, C, n_pad), image.dtype),
        grid_spec=pltpu.PrefetchScalarGridSpec(
            num_scalar_prefetch=1,
            grid=grid,
            in_specs=[
                pl.BlockSpec((1, C, tile_n), lambda b, n, xs: (b, 0, n)),
            ],
            out_specs=pl.BlockSpec((1, C, tile_n), lambda b, n, xs: (b, 0, n)),
        ),
        compiler_params=pltpu.CompilerParams(
            dimension_semantics=("parallel", "parallel"),
        ),
    )(x_scalars, img_flat)

    return out_flat[:, :, :N].reshape(B, C, H, W)


def _reference(image, x):
    """Pure-JAX reference mirroring the PyTorch forward exactly."""
    cmin = jnp.min(image, axis=1, keepdims=True)
    cmax = jnp.max(image, axis=1, keepdims=True)
    var = cmax - cmin
    ran = cmax + cmin
    mean = ran / 2.0
    is_positive = (x >= 0).astype(jnp.float32)
    m = (mean < 0.5).astype(jnp.float32)
    s = var / (ran + EPS) * m + var / (2.0 - ran + EPS) * (1.0 - m)
    m = ((x + s) > 1.0).astype(jnp.float32)
    a_pos = s * m + (1.0 - x) * (1.0 - m)
    a_pos = 1.0 / (a_pos + EPS) - 1.0
    a_neg = 1.0 + x
    a = a_pos * is_positive + a_neg * (1.0 - is_positive)
    out = image * is_positive + mean * (1.0 - is_positive) + (image - mean) * a
    return jnp.clip(out, 0.0, 1.0)


if __name__ == "__main__":
    key = jax.random.PRNGKey(0)
    k_img, k_x = jax.random.split(key)

    B, C, H, W = 2, 4, 16, 16
    image = jax.random.uniform(k_img, (B, C, H, W), dtype=jnp.float32)
    # saturation strength in [-1, 1], one scalar per batch element
    x = jax.random.uniform(k_x, (B, 1, 1, 1), dtype=jnp.float32) * 2.0 - 1.0

    out = saturation_filter(image, x)
    out = jax.block_until_ready(out)

    ref = _reference(image, x)
    assert out.shape == (B, C, H, W)
    assert jnp.allclose(out, ref, atol=1e-5, rtol=1e-5), "mismatch vs reference"

    print("KERNEL_OK")
</pallas_src>

<mosaic_0001>
module attributes {stable_mosaic.version = 11 : i64} {
  func.func @_saturation_kernel(%arg0: i32, %arg1: i32, %arg2: memref<2xf32, #tpu.memory_space<smem>>, %arg3: memref<1x4x256xf32, #tpu.memory_space<vmem>>, %arg4: memref<1x4x256xf32, #tpu.memory_space<vmem>>) attributes {dimension_semantics = [#tpu.dimension_semantics<parallel>, #tpu.dimension_semantics<parallel>], iteration_bounds = array<i64: 2, 1>, scalar_prefetch = 1 : i64, scratch_operands = 0 : i64, tpu.core_type = #tpu.core_type<tc>, window_params = [{transform_indices = @transform_0, window_bounds = array<i64: 1, 4, 256>}, {transform_indices = @transform_1, window_bounds = array<i64: 1, 4, 256>}]} {
    %0 = arith.index_cast %arg0 : i32 to index
    %1 = memref.load %arg2[%0] : memref<2xf32, #tpu.memory_space<smem>>
    %c0 = arith.constant 0 : index
    %c0_0 = arith.constant 0 : index
    %c0_1 = arith.constant 0 : index
    %2 = vector.load %arg3[%c0, %c0_0, %c0_1] : memref<1x4x256xf32, #tpu.memory_space<vmem>>, vector<1x4x256xf32>
    %cst = arith.constant dense<0x7F800000> : vector<1x256xf32>
    %3 = vector.multi_reduction <minimumf>, %2, %cst [1] : vector<1x4x256xf32> to vector<1x256xf32>
    %4 = vector.shape_cast %3 : vector<1x256xf32> to vector<1x1x256xf32>
    %cst_2 = arith.constant dense<0xFF800000> : vector<1x256xf32>
    %5 = vector.multi_reduction <maximumf>, %2, %cst_2 [1] : vector<1x4x256xf32> to vector<1x256xf32>
    %6 = vector.shape_cast %5 : vector<1x256xf32> to vector<1x1x256xf32>
    %7 = arith.subf %6, %4 : vector<1x1x256xf32>
    %8 = arith.addf %6, %4 : vector<1x1x256xf32>
    %cst_3 = arith.constant 5.000000e-01 : f32
    %9 = vector.broadcast %cst_3 : f32 to vector<1x1x256xf32>
    %10 = arith.mulf %8, %9 : vector<1x1x256xf32>
    %cst_4 = arith.constant 0.000000e+00 : f32
    %11 = arith.cmpf oge, %1, %cst_4 : f32
    %12 = arith.extui %11 : i1 to i32
    %c0_i32 = arith.constant 0 : i32
    %13 = arith.cmpi ne, %12, %c0_i32 : i32
    scf.if %13 {
      %cst_7 = arith.constant 5.000000e-01 : f32
      %17 = vector.broadcast %cst_7 : f32 to vector<1x1x256xf32>
      %18 = arith.cmpf olt, %10, %17 : vector<1x1x256xf32>
      %cst_8 = arith.constant 2.000000e+00 : f32
      %19 = vector.broadcast %cst_8 : f32 to vector<1x1x256xf32>
      %20 = arith.subf %19, %8 : vector<1x1x256xf32>
      %21 = arith.select %18, %8, %20 : vector<1x1x256xi1>, vector<1x1x256xf32>
      %cst_9 = arith.constant 9.99999997E-7 : f32
      %22 = vector.broadcast %cst_9 : f32 to vector<1x1x256xf32>
      %23 = arith.addf %21, %22 : vector<1x1x256xf32>
      %24 = arith.divf %7, %23 : vector<1x1x256xf32>
      %25 = vector.broadcast %1 : f32 to vector<1x1x256xf32>
      %26 = arith.addf %25, %24 : vector<1x1x256xf32>
      %cst_10 = arith.constant 1.000000e+00 : f32
      %27 = vector.broadcast %cst_10 : f32 to vector<1x1x256xf32>
      %28 = arith.cmpf ogt, %26, %27 : vector<1x1x256xf32>
      %cst_11 = arith.constant 1.000000e+00 : f32
      %29 = arith.subf %cst_11, %1 : f32
      %30 = vector.broadcast %29 : f32 to vector<1x1x256xf32>
      %31 = arith.select %28, %24, %30 : vector<1x1x256xi1>, vector<1x1x256xf32>
      %cst_12 = arith.constant 9.99999997E-7 : f32
      %32 = vector.broadcast %cst_12 : f32 to vector<1x1x256xf32>
      %33 = arith.addf %31, %32 : vector<1x1x256xf32>
      %cst_13 = arith.constant 1.000000e+00 : f32
      %34 = vector.broadcast %cst_13 : f32 to vector<1x1x256xf32>
      %35 = arith.divf %34, %33 : vector<1x1x256xf32>
      %cst_14 = arith.constant 1.000000e+00 : f32
      %36 = vector.broadcast %cst_14 : f32 to vector<1x1x256xf32>
      %37 = arith.subf %35, %36 : vector<1x1x256xf32>
      %38 = vector.broadcast %10 : vector<1x1x256xf32> to vector<1x4x256xf32>
      %39 = arith.subf %2, %38 : vector<1x4x256xf32>
      %40 = vector.broadcast %37 : vector<1x1x256xf32> to vector<1x4x256xf32>
      %41 = arith.mulf %39, %40 : vector<1x4x256xf32>
      %42 = arith.addf %2, %41 : vector<1x4x256xf32>
      %cst_15 = arith.constant 0.000000e+00 : f32
      %cst_16 = arith.constant 1.000000e+00 : f32
      %43 = vector.broadcast %cst_15 : f32 to vector<1x4x256xf32>
      %44 = arith.maximumf %43, %42 : vector<1x4x256xf32>
      %45 = vector.broadcast %cst_16 : f32 to vector<1x4x256xf32>
      %46 = arith.minimumf %45, %44 : vector<1x4x256xf32>
      %c0_17 = arith.constant 0 : index
      %c0_18 = arith.constant 0 : index
      %c0_19 = arith.constant 0 : index
      %47 = vector.load %arg4[%c0_17, %c0_18, %c0_19] : memref<1x4x256xf32, #tpu.memory_space<vmem>>, vector<1x4x256xf32>
      tpu.vector_store %arg4[%c0_17, %c0_18, %c0_19], %46 {strides = array<i32>} : memref<1x4x256xf32, #tpu.memory_space<vmem>>, vector<1x4x256xf32>,
    } else {
    }
    %cst_5 = arith.constant 0.000000e+00 : f32
    %14 = arith.cmpf olt, %1, %cst_5 : f32
    %15 = arith.extui %14 : i1 to i32
    %c0_i32_6 = arith.constant 0 : i32
    %16 = arith.cmpi ne, %15, %c0_i32_6 : i32
    scf.if %16 {
      %17 = vector.broadcast %10 : vector<1x1x256xf32> to vector<1x4x256xf32>
      %18 = arith.subf %2, %17 : vector<1x4x256xf32>
      %cst_7 = arith.constant 1.000000e+00 : f32
      %19 = arith.addf %cst_7, %1 : f32
      %20 = vector.broadcast %19 : f32 to vector<1x4x256xf32>
      %21 = arith.mulf %18, %20 : vector<1x4x256xf32>
      %22 = vector.broadcast %10 : vector<1x1x256xf32> to vector<1x4x256xf32>
      %23 = arith.addf %22, %21 : vector<1x4x256xf32>
      %cst_8 = arith.constant 0.000000e+00 : f32
      %cst_9 = arith.constant 1.000000e+00 : f32
      %24 = vector.broadcast %cst_8 : f32 to vector<1x4x256xf32>
      %25 = arith.maximumf %24, %23 : vector<1x4x256xf32>
      %26 = vector.broadcast %cst_9 : f32 to vector<1x4x256xf32>
      %27 = arith.minimumf %26, %25 : vector<1x4x256xf32>
      %c0_10 = arith.constant 0 : index
      %c0_11 = arith.constant 0 : index
      %c0_12 = arith.constant 0 : index
      %28 = vector.load %arg4[%c0_10, %c0_11, %c0_12] : memref<1x4x256xf32, #tpu.memory_space<vmem>>, vector<1x4x256xf32>
      tpu.vector_store %arg4[%c0_10, %c0_11, %c0_12], %27 {strides = array<i32>} : memref<1x4x256xf32, #tpu.memory_space<vmem>>, vector<1x4x256xf32>,
    } else {
    }
    return
  }
  func.func @transform_0(%arg0: i32, %arg1: i32, %arg2: memref<2xf32, #tpu.memory_space<smem>>) -> (i32, i32, i32) {
    %c0_i32 = arith.constant 0 : i32
    %c0_i32_0 = arith.constant 0 : i32
    return %arg0, %c0_i32, %arg1 : i32, i32, i32
  }
  func.func @transform_1(%arg0: i32, %arg1: i32, %arg2: memref<2xf32, #tpu.memory_space<smem>>) -> (i32, i32, i32) {
    %c0_i32 = arith.constant 0 : i32
    %c0_i32_0 = arith.constant 0 : i32
    return %arg0, %c0_i32, %arg1 : i32, i32, i32
  }
}

</mosaic_0001>

<llo_original>
// kernel: tpu_custom_call.1
$region0: #{tpu_custom_call.1}
  #allocation0 [shape = 'u32[]', space=smem, size = 0x4, offset = 0x4, fixed_abs, tag = 'smem constant byte address 0x4 - core index']
  #allocation1 [shape = 'u32[144,128]{1,0:T(1,128)}', space=vmem, size = 0x12000, scoped, tag = 'internal scratch']
  #allocation2 [shape = 's32[1]{0}', space=sflag, size = 0x4, scoped, tag = 'scoped memory for tpu_custom_call.1']
  #allocation3 [shape = 'u8[512]{0}', space=smem, size = 0x200, scoped, tag = 'prefetched SMEM operand 0']
  %s0 = inlined_call_operand.hbm [shape: f32[2], index: 0, kind: input, shape index: {}]
  %s1 = inlined_call_operand.hbm [shape: f32[2,4,256], index: 1, kind: input, shape index: {}]
  %s2 = inlined_call_operand.hbm [shape: f32[2,4,256], index: 2, kind: output, shape index: {}]
  %s3 = sld [smem:[#allocation0]]
  $region49: #{tpu_custom_call.1} parent=0
    _
  %s5 = ssub.s32 1, %s3
  %s6 = scalar_select 0, %s5, %s3
  %8 = dma.hbm_to_smem %s0, 16, [#allocation3], [#allocation2]
  %9 = dma.done [#allocation2], 16
  %10 = sfence
  $region1: #{tpu_custom_call.1} parent=0
    #allocation4 [shape = 'u8[8192]{0}', space=vmem, size = 0x2000, scoped, tag = 'input window, operand 1']
    #allocation5 [shape = 's32[2]{0}', space=sflag, size = 0x8, scoped, tag = 'scoped memory for tpu_custom_call.1']
    #allocation6 [shape = 's32[2]{0}', space=sflag, size = 0x8, scoped, tag = 'scoped memory for tpu_custom_call.1']
    #allocation7 [shape = 'u8[8192]{0}', space=vmem, size = 0x2000, scoped, tag = 'output window, operand 0']
    %11 = vsyncpa [#allocation5], 0
    %s12 = scalar_lea.sflag [#allocation5], 1
    %13 = vsyncpa %s12, 0
    %14 = vsyncpa [#allocation6], 0
    %s15 = scalar_lea.sflag [#allocation6], 1
    %16 = vsyncpa %s15, 0
    loop: start=0, step=1, limit=4
    $region2: #{tpu_custom_call.1} parent=1 // loop_pre_header
      _
    $region3: #{tpu_custom_call.1} parent=1 // loop_header
      %s18 = sphi 0, %s22
      %p19 = scmp.ge.s32.totalorder %s18, 4
      %s25 = sphi 0, %s37
      %s26 = sphi 0, %s33
      %s27 = sphi 0, %s25
      %s28 = sphi 0, %s26
      %s29 = sphi 0, %s27
      %s30 = sphi 0, %s28
      %s42 = sphi 0, %s44
      %s45 = sphi 0, %s42
      %s46 = sphi 0, %s45
      %s62 = sphi 0, %s46
      %s70 = sphi 0, %s72
      %s73 = sphi 0, %s70
      %s74 = sphi 0, %s73
      %s90 = sphi 0, %s74
    $region4: #{tpu_custom_call.1} parent=1 // loop_header_branch
      %21 = sbr.rel (%p19) target = $region8
    $region5: #{tpu_custom_call.1} parent=1 // loop_body
      %s23 = ssub.s32 %s18, 1
      %s24 = ssub.s32 %s18, 2
      %s31 = sadd.s32 1, %s26
      %p32 = scmp.ge.s32.totalorder %s31, 1
      %s33 = scalar_select %p32, 0, %s31
      %s34 = sadd.s32 1, %s25
      %s35 = scalar_select %p32, %s34, %s25
      %p36 = scmp.ge.s32.totalorder %s35, 2
      %s37 = scalar_select %p36, 0, %s35
      %s38 = ssub.s32 %s25, %s37
      %s39 = ssub.s32 %s26, %s33
      %s40 = sor.u32 %s38, %s39
      %p41 = scmp.eq.s32.totalorder %s40, 0
      %s43 = sadd.s32 %s42, 1
      %s44 = scalar_select %p41, %s42, %s43
      %p47 = pneg %p41
      %p48 = scmp.eq.s32.totalorder %s18, 1
      %p49 = por %p47, %p48
      %p50 = scmp.ne.s32.totalorder %s42, %s45
      %p51 = scmp.eq.s32.totalorder %s18, 0
      %p52 = por %p50, %p51
      %p53 = scmp.ne.s32.totalorder %s42, %s45
      %p54 = scmp.eq.s32.totalorder %s23, 1
      %p55 = por %p53, %p54
      %p56 = scmp.ne.s32.totalorder %s45, %s46
      %p57 = scmp.eq.s32.totalorder %s23, 0
      %p58 = por %p56, %p57
      %p59 = scmp.ne.s32.totalorder %s45, %s46
      %p60 = scmp.eq.s32.totalorder %s24, 1
      %p61 = por %p59, %p60
      %p63 = scmp.ne.s32.totalorder %s46, %s62
      %p64 = scmp.eq.s32.totalorder %s24, 0
      %p65 = por %p63, %p64
      %s66 = ssub.s32 %s25, %s37
      %s67 = ssub.s32 %s26, %s33
      %s68 = sor.u32 %s66, %s67
      %p69 = scmp.eq.s32.totalorder %s68, 0
      %s71 = sadd.s32 %s70, 1
      %s72 = scalar_select %p69, %s70, %s71
      %p75 = pneg %p69
      %p76 = scmp.eq.s32.totalorder %s18, 1
      %p77 = por %p75, %p76
      %p78 = scmp.ne.s32.totalorder %s70, %s73
      %p79 = scmp.eq.s32.totalorder %s18, 0
      %p80 = por %p78, %p79
      %p81 = scmp.ne.s32.totalorder %s70, %s73
      %p82 = scmp.eq.s32.totalorder %s23, 1
      %p83 = por %p81, %p82
      %p84 = scmp.ne.s32.totalorder %s73, %s74
      %p85 = scmp.eq.s32.totalorder %s23, 0
      %p86 = por %p84, %p85
      %p87 = scmp.ne.s32.totalorder %s73, %s74
      %p88 = scmp.eq.s32.totalorder %s24, 1
      %p89 = por %p87, %p88
      %p91 = scmp.ne.s32.totalorder %s74, %s90
      %p92 = scmp.eq.s32.totalorder %s24, 0
      %p93 = por %p91, %p92
      %p94 = scmp.le.s32.totalorder 1, %s18
      %p95 = scmp.lt.s32.totalorder %s18, 3
      %p96 = pnand %p94, %p95
      %p97 = pneg %p96
      // Predicated region
      $region9: #{tpu_custom_call.1} parent=5 // pred_check
        _
      $region10: #{tpu_custom_call.1} parent=5 // pred_check_branch
        %99 = sbr.rel (%p96) target = $region12
      $region11: #{tpu_custom_call.1} parent=5 // pred_region
        %s100 = ssub.s32 %s18, 1
      $region12: #{tpu_custom_call.1} parent=5 // pred_fallthru
        _
      %p101 = scmp.lt.s32.totalorder %s18, 2
      // Predicated region
      $region13: #{tpu_custom_call.1} parent=5 // pred_check
        %p102 = pneg %p101
      $region14: #{tpu_custom_call.1} parent=5 // pred_check_branch
        %104 = sbr.rel (%p102) target = $region16
      $region15: #{tpu_custom_call.1} parent=5 // pred_region
        // Predicated region
        $region17: #{tpu_custom_call.1} parent=15 // pred_check
          %p105 = pneg %p52
        $region18: #{tpu_custom_call.1} parent=15 // pred_check_branch
          %107 = sbr.rel (%p105) target = $region20
        $region19: #{tpu_custom_call.1} parent=15 // pred_region
          %s108 = sand.u32 %s42, 1
          %s109 = scalar_lea.sflag [#allocation5], %s108
          %s110 = sand.u32 %s42, 1
          %s111 = smul.addr %s110, 8
          %s112 = scalar_lea.vmem [#allocation4], %s111
          %s113 = smul.u32 2, %s26
          %s115 = ssub.s32 128, 128
          %116 = vsyncadd %s109, %s115
          %s117 = smul.addr %s25, 2
          %s118 = sadd.s32 %s113, %s117
          %s119 = smul.addr %s118, 64
          %s120 = scalar_lea.hbm %s1, %s119
          %s122 = sshll.u32 %s112, 4
          %s123 = int_to_ptr.vmem [resolvable:$true] %s122
          %125 = dma.hbm_to_vmem [thread:$0]  %s120, 128, %s123, %s109
        $region20: #{tpu_custom_call.1} parent=15 // pred_fallthru
          _
      $region16: #{tpu_custom_call.1} parent=5 // pred_fallthru
        _
      %p126 = scmp.le.s32.totalorder 1, %s18
      %p127 = scmp.lt.s32.totalorder %s18, 3
      %p128 = pnand %p126, %p127
      %p129 = pneg %p128
      // Predicated region
      $region21: #{tpu_custom_call.1} parent=5 // pred_check
        _
      $region22: #{tpu_custom_call.1} parent=5 // pred_check_branch
        %131 = sbr.rel (%p128) target = $region24
      $region23: #{tpu_custom_call.1} parent=5 // pred_region
        %s132 = ssub.s32 %s18, 1
        %s133 = sand.u32 %s45, 1
        %s134 = scalar_lea.sflag [#allocation5], %s133
        %s135 = sand.u32 %s45, 1
        %s136 = smul.addr %s135, 8
        %s137 = scalar_lea.vmem [#allocation4], %s136
        // Predicated region
        $region25: #{tpu_custom_call.1} parent=23 // pred_check
          %p138 = pneg %p58
        $region26: #{tpu_custom_call.1} parent=23 // pred_check_branch
          %140 = sbr.rel (%p138) target = $region28
        $region27: #{tpu_custom_call.1} parent=23 // pred_region
          %141 = dma.done %s134, 128
        $region28: #{tpu_custom_call.1} parent=23 // pred_fallthru
          _
        %s142 = sand.u32 %s45, 1
        %s143 = scalar_lea.sflag [#allocation5], %s142
        %s144 = sand.u32 %s45, 1
        %s145 = smul.addr %s144, 8
        %s146 = scalar_lea.vmem [#allocation4], %s145
        %p147 = pneg %p58
        %p148 = pneg %p55
        %p149 = pneg %p86
        %p150 = pneg %p83
        %s151 = sand.u32 %s73, 1
        %s152 = scalar_lea.sflag [#allocation6], %s151
        %s153 = sand.u32 %s73, 1
        %s154 = smul.addr %s153, 8
        %s155 = scalar_lea.vmem [#allocation7], %s154
        %s156 = smul.u32 2, %s28
        %s157 = smul.u32 2, %s28
        %s158 = sld [smem:[#allocation3 + %s27]]
        %v159 = vld [vmem:[%s137] sm:$0xff]
        %v161 = vcombine.high %v159, %v159
        %vm163 = vcmask 1043456
        %v164 = vsel %vm163, %v159, inf
        %v165 = vrot.slane %v164, 4
        %v166 = vmin.f32 %v164, %v165
        %v167 = vrot.slane %v166, 2
        %v168 = vmin.f32 %v166, %v167
        %v169 = vrot.slane %v168, 1
        %v170 = vmin.f32 %v168, %v169
        %v171 = vsel %vm163, %v161, inf
        %v172 = vrot.slane %v171, 4
        %v173 = vmin.f32 %v171, %v172
        %v174 = vrot.slane %v173, 2
        %v175 = vmin.f32 %v173, %v174
        %v176 = vrot.slane %v175, 1
        %v177 = vmin.f32 %v175, %v176
        %v178 = vsel %vm163, %v159, -inf
        %v179 = vrot.slane %v178, 4
        %v180 = vmax.f32 %v178, %v179
        %v181 = vrot.slane %v180, 2
        %v182 = vmax.f32 %v180, %v181
        %v183 = vrot.slane %v182, 1
        %v184 = vmax.f32 %v182, %v183
        %v185 = vsel %vm163, %v161, -inf
        %v186 = vrot.slane %v185, 4
        %v187 = vmax.f32 %v185, %v186
        %v188 = vrot.slane %v187, 2
        %v189 = vmax.f32 %v187, %v188
        %v190 = vrot.slane %v189, 1
        %v191 = vmax.f32 %v189, %v190
        %v192 = vsub.f32 %v184, %v170
        %v193 = vsub.f32 %v191, %v177
        %v194 = vadd.f32 %v184, %v170
        %v195 = vadd.f32 %v191, %v177
        %v196 = vmul.f32 %v194, 0.5
        %v197 = vmul.f32 %v195, 0.5
        %p198 = scmp.ge.f32.partialorder %s158, 0.0
        // Predicated region
        $region29: #{tpu_custom_call.1} parent=23 // pred_check
          %p199 = pneg %p198
        $region30: #{tpu_custom_call.1} parent=23 // pred_check_branch
          %201 = sbr.rel (%p199) target = $region32
        $region31: #{tpu_custom_call.1} parent=23 // pred_region
          %vm202 = vcmp.lt.f32.partialorder %v196, 0.5
          %vm203 = vcmp.lt.f32.partialorder %v197, 0.5
          %v204 = vsub.f32 2.0, %v194
          %v205 = vsub.f32 2.0, %v195
          %v206 = vsel %vm202, %v194, %v204
          %v207 = vsel %vm203, %v195, %v205
          %v208 = vadd.f32 %v206, 1e-06
          %v209 = vadd.f32 %v207, 1e-06
          %v210 = vrcp.pop %v208
          %v211 = vmul.f32 %v192, %v210
          %v212 = vrcp.pop %v209
          %v213 = vmul.f32 %v193, %v212
          %v214 = vstv %s158
          %v215 = vadd.f32 %v214, %v211
          %v216 = vadd.f32 %v214, %v213
          %vm217 = vcmp.gt.f32.partialorder %v215, 1.0
          %vm218 = vcmp.gt.f32.partialorder %v216, 1.0
          %s219 = ssub.f32 1.0, %s158
          %v220 = vstv %s219
          %v221 = vsel %vm217, %v211, %v220
          %v222 = vsel %vm218, %v213, %v220
          %v223 = vadd.f32 %v221, 1e-06
          %v224 = vadd.f32 %v222, 1e-06
          %v225 = vrcp.pop %v223
          %v226 = vmul.f32 1.0, %v225
          %v227 = vrcp.pop %v224
          %v228 = vmul.f32 1.0, %v227
          %v229 = vsub.f32 %v226, 1.0
          %v230 = vsub.f32 %v228, 1.0
          %v233 = vcombine.low %v196, %v197
          %v235 = vsub.f32 %v159, %v233
          %v238 = vcombine.low %v229, %v230
          %v240 = vmul.f32 %v235, %v238
          %v241 = vadd.f32 %v159, %v240
          %v242 = vmax.f32 %v241, 0.0
          %v243 = vmin.f32 %v242, 1.0
          %244 = vst [vmem:[%s155] sm:$0xff] %v243
        $region32: #{tpu_custom_call.1} parent=23 // pred_fallthru
          _
        %p245 = scmp.lt.f32.partialorder %s158, 0.0
        // Predicated region
        $region33: #{tpu_custom_call.1} parent=23 // pred_check
          %p246 = pneg %p245
        $region34: #{tpu_custom_call.1} parent=23 // pred_check_branch
          %248 = sbr.rel (%p246) target = $region36
        $region35: #{tpu_custom_call.1} parent=23 // pred_region
          %v251 = vcombine.low %v196, %v197
          %v253 = vsub.f32 %v159, %v251
          %s254 = sadd.f32 %s158, 1.0
          %v255 = vstv %s254
          %v256 = vmul.f32 %v253, %v255
          %v258 = vcombine.high %v256, %v256
          %v260 = vadd.f32 %v196, %v256
          %v261 = vadd.f32 %v197, %v258
          %v262 = vmax.f32 %v260, 0.0
          %v263 = vmax.f32 %v261, 0.0
          %v264 = vmin.f32 %v262, 1.0
          %v265 = vmin.f32 %v263, 1.0
          %v268 = vcombine.low %v264, %v265
          %270 = vst [vmem:[%s155] sm:$0xff] %v268
        $region36: #{tpu_custom_call.1} parent=23 // pred_fallthru
          _
        %s271 = sand.u32 %s73, 1
        %s272 = scalar_lea.sflag [#allocation6], %s271
        %s273 = sand.u32 %s73, 1
        %s274 = smul.addr %s273, 8
        %s275 = scalar_lea.vmem [#allocation7], %s274
        // Predicated region
        $region37: #{tpu_custom_call.1} parent=23 // pred_check
          %p276 = pneg %p83
        $region38: #{tpu_custom_call.1} parent=23 // pred_check_branch
          %278 = sbr.rel (%p276) target = $region40
        $region39: #{tpu_custom_call.1} parent=23 // pred_region
          %s279 = smul.u32 2, %s28
          %s281 = ssub.s32 128, 128
          %282 = vsyncadd %s272, %s281
          %s283 = smul.addr %s27, 2
          %s284 = sadd.s32 %s279, %s283
          %s285 = smul.addr %s284, 64
          %s286 = scalar_lea.hbm %s2, %s285
          %s288 = sshll.u32 %s275, 4
          %s289 = int_to_ptr.vmem [resolvable:$true] %s288
          %291 = dma.vmem_to_hbm [thread:$0]  %s289, 128, %s286, %s272
        $region40: #{tpu_custom_call.1} parent=23 // pred_fallthru
          _
      $region24: #{tpu_custom_call.1} parent=5 // pred_fallthru
        _
      %p292 = scmp.le.s32.totalorder 2, %s18
      // Predicated region
      $region41: #{tpu_custom_call.1} parent=5 // pred_check
        %p293 = pneg %p292
      $region42: #{tpu_custom_call.1} parent=5 // pred_check_branch
        %295 = sbr.rel (%p293) target = $region44
      $region43: #{tpu_custom_call.1} parent=5 // pred_region
        %s296 = ssub.s32 %s18, 2
        // Predicated region
        $region45: #{tpu_custom_call.1} parent=43 // pred_check
          %p297 = pneg %p89
        $region46: #{tpu_custom_call.1} parent=43 // pred_check_branch
          %299 = sbr.rel (%p297) target = $region48
        $region47: #{tpu_custom_call.1} parent=43 // pred_region
          %s300 = sand.u32 %s74, 1
          %s301 = scalar_lea.sflag [#allocation6], %s300
          %s302 = sand.u32 %s74, 1
          %s303 = smul.addr %s302, 8
          %s304 = scalar_lea.vmem [#allocation7], %s303
          %305 = dma.done %s301, 128
        $region48: #{tpu_custom_call.1} parent=43 // pred_fallthru
          _
      $region44: #{tpu_custom_call.1} parent=5 // pred_fallthru
        _
    $region6: #{tpu_custom_call.1} parent=1 // loop_footer
      %s22 = sadd.s32 1, %s18
    $region7: #{tpu_custom_call.1} parent=1 // loop_footer_branch
      %17 = sbr.rel target = $region3
    $region8: #{tpu_custom_call.1} parent=1 // loop_exit
      _
    %306 = vsyncpa [#allocation5], 1
    %s307 = scalar_lea.sflag [#allocation5], 1
    %308 = vsyncpa %s307, 1
    %309 = vsyncpa [#allocation6], 1
    %s310 = scalar_lea.sflag [#allocation6], 1
    %311 = vsyncpa %s310, 1

</llo_original>
